<compile_context>
chip_gen: v7x
topology: tpu7x:2x2x1
jax: 0.10.0
libtpu: 0.0.40
codegen_flags: <defaults>
</compile_context>

<pallas_src>
import functools

import jax
import jax.numpy as jnp
from jax.experimental import pallas as pl
from jax.experimental.pallas import tpu as pltpu

_VMEM_LIMIT = 32 * 1024 * 1024  # explicit scoped-VMEM limit, valid on v5e/v6e/v7x


def _round_up(x, m):
    return (x + m - 1) // m * m


# ---------------------------------------------------------------------------
# Tiled matmul kernel: C = A @ B (+bias) (+residual) (+ReLU), f32 accumulation
# ---------------------------------------------------------------------------
def _mm_kernel(a_ref, b_ref, bias_ref, *rest, relu, has_res):
    if has_res:
        res_ref, o_ref, acc_ref = rest
    else:
        o_ref, acc_ref = rest
    k = pl.program_id(2)

    @pl.when(k == 0)
    def _init():
        acc_ref[...] = jnp.zeros_like(acc_ref)

    acc_ref[...] += jnp.dot(a_ref[...], b_ref[...],
                            preferred_element_type=jnp.float32)

    @pl.when(k == pl.num_programs(2) - 1)
    def _epilogue():
        out = acc_ref[...] + bias_ref[...]          # bias only once, at k==last
        if has_res:
            out = out + res_ref[...].astype(jnp.float32)
        if relu:
            out = jnp.maximum(out, 0.0)
        o_ref[...] = out.astype(o_ref.dtype)


def _pick_k_tile(k):
    """128-aligned K tile that minimizes padding (128-multiples work on v5e too)."""
    kp0 = _round_up(k, 128)
    if kp0 <= 512:
        return kp0, kp0
    tk, kp = 128, kp0
    for c in (256, 384, 512):
        c_kp = _round_up(k, c)
        if c_kp <= kp:
            tk, kp = c, c_kp
    return tk, kp


def matmul_fused(a, b, bias, residual=None, *, relu, out_dtype=jnp.bfloat16):
    """a:(M,K) @ b:(K,N) + bias (+residual) (+ReLU). bf16 MXU, f32 accumulate."""
    m, k = a.shape
    k2, n = b.shape
    assert k == k2

    tm = min(256, _round_up(m, 16))
    tn = min(256, _round_up(n, 128))
    tk, kp = _pick_k_tile(k)
    mp = _round_up(m, tm)
    np_ = _round_up(n, tn)

    a_p = jnp.pad(a.astype(jnp.bfloat16), ((0, mp - m), (0, kp - k)))
    b_p = jnp.pad(b.astype(jnp.bfloat16), ((0, kp - k), (0, np_ - n)))
    bias_p = jnp.pad(bias.astype(jnp.float32), (0, np_ - n)).reshape(1, np_)

    has_res = residual is not None
    in_specs = [
        pl.BlockSpec((tm, tk), lambda i, j, kk: (i, kk)),
        pl.BlockSpec((tk, tn), lambda i, j, kk: (kk, j)),
        pl.BlockSpec((1, tn), lambda i, j, kk: (0, j)),
    ]
    args = [a_p, b_p, bias_p]
    res_bytes = 0
    if has_res:
        r_p = jnp.pad(residual.astype(jnp.bfloat16), ((0, mp - m), (0, np_ - n)))
        in_specs.append(pl.BlockSpec((tm, tn), lambda i, j, kk: (i, j)))
        args.append(r_p)
        res_bytes = r_p.size * 2

    out_itemsize = 2 if out_dtype == jnp.bfloat16 else 4
    cost = pl.CostEstimate(
        flops=2 * mp * np_ * kp,
        transcendentals=0,
        bytes_accessed=(a_p.size + b_p.size) * 2 + res_bytes
        + mp * np_ * out_itemsize + np_ * 4,
    )

    out = pl.pallas_call(
        functools.partial(_mm_kernel, relu=relu, has_res=has_res),
        out_shape=jax.ShapeDtypeStruct((mp, np_), out_dtype),
        grid_spec=pltpu.PrefetchScalarGridSpec(
            num_scalar_prefetch=0,
            grid=(mp // tm, np_ // tn, kp // tk),
            in_specs=in_specs,
            out_specs=pl.BlockSpec((tm, tn), lambda i, j, kk: (i, j)),
            scratch_shapes=[pltpu.VMEM((tm, tn), jnp.float32)],
        ),
        compiler_params=pltpu.CompilerParams(
            dimension_semantics=("parallel", "parallel", "arbitrary"),
            vmem_limit_bytes=_VMEM_LIMIT,
        ),
        cost_estimate=cost,
    )(*args)
    return out[:m, :n]


# ---------------------------------------------------------------------------
# Maxpool 3x3 stride 2: row-tiled elementwise max over the 9 tap views
# ---------------------------------------------------------------------------
def _max9_kernel(*refs):
    o_ref = refs[-1]
    acc = refs[0][...]
    for r in refs[1:-1]:
        acc = jnp.maximum(acc, r[...])
    o_ref[...] = acc


def maxpool_3x3_s2(x):
    n, h, w, c = x.shape
    xp = jnp.pad(x, ((0, 0), (1, 1), (1, 1), (0, 0)),
                 constant_values=-jnp.inf)
    ho = (h - 1) // 2 + 1
    wo = (w - 1) // 2 + 1
    taps = []
    for i in range(3):
        for j in range(3):
            taps.append(xp[:, i:i + 2 * ho:2, j:j + 2 * wo:2, :]
                        .reshape(n * ho, wo * c))           # lane-dense last dim

    m_rows = n * ho
    lanes = wo * c
    itemsize = 2 if x.dtype == jnp.bfloat16 else 4
    bytes_per_row = 10 * lanes * itemsize * 2                # 9 in + 1 out, 2 bufs
    tm = max(8, min(512, (8 * 1024 * 1024) // max(bytes_per_row, 1)))
    tm = (tm // 8) * 8
    tm = min(tm, _round_up(m_rows, 8))
    mp = _round_up(m_rows, tm)
    if mp != m_rows:
        taps = [jnp.pad(t, ((0, mp - m_rows), (0, 0))) for t in taps]

    spec = pl.BlockSpec((tm, lanes), lambda i: (i, 0))
    out = pl.pallas_call(
        _max9_kernel,
        out_shape=jax.ShapeDtypeStruct((mp, lanes), x.dtype),
        grid_spec=pltpu.PrefetchScalarGridSpec(
            num_scalar_prefetch=0, grid=(mp // tm,),
            in_specs=[spec] * 9, out_specs=spec),
        compiler_params=pltpu.CompilerParams(
            dimension_semantics=("parallel",),
            vmem_limit_bytes=_VMEM_LIMIT),
    )(*taps)
    return out[:m_rows].reshape(n, ho, wo, c)


# ---------------------------------------------------------------------------
# Global average pool (AdaptiveAvgPool2d((1,1))), tiled over channel blocks
# ---------------------------------------------------------------------------
def _avgpool_kernel(x_ref, o_ref, *, inv_hw):
    o_ref[...] = jnp.sum(x_ref[...].astype(jnp.float32), axis=1) * inv_hw


def global_avgpool(x):
    n, h, w, c = x.shape
    hw = h * w
    xr = x.reshape(n, hw, c)
    tc = 256 if c % 256 == 0 else (128 if c % 128 == 0 else c)
    return pl.pallas_call(
        functools.partial(_avgpool_kernel, inv_hw=1.0 / hw),
        out_shape=jax.ShapeDtypeStruct((n, c), jnp.float32),
        grid_spec=pltpu.PrefetchScalarGridSpec(
            num_scalar_prefetch=0, grid=(c // tc,),
            in_specs=[pl.BlockSpec((n, hw, tc), lambda i: (0, 0, i))],
            out_specs=pl.BlockSpec((n, tc), lambda i: (0, i))),
        compiler_params=pltpu.CompilerParams(
            dimension_semantics=("parallel",),
            vmem_limit_bytes=_VMEM_LIMIT),
    )(xr)


# ---------------------------------------------------------------------------
# Conv(+folded eval-mode BN)(+fused epilogue) glue
# ---------------------------------------------------------------------------
def _im2col(x, kh, kw, stride, pad):
    n, h, w, c = x.shape
    xp = jnp.pad(x, ((0, 0), (pad, pad), (pad, pad), (0, 0)))
    ho = (h + 2 * pad - kh) // stride + 1
    wo = (w + 2 * pad - kw) // stride + 1
    taps = []
    for i in range(kh):
        for j in range(kw):
            taps.append(xp[:, i:i + stride * ho:stride,
                           j:j + stride * wo:stride, :])
    cols = jnp.concatenate(taps, axis=-1)          # (N, Ho, Wo, kh*kw*C)
    return cols, ho, wo


def conv_bn(x, wb, *, stride, pad, relu, residual=None,
            out_dtype=jnp.bfloat16):
    """Conv2d(bias=False)+folded BN as a tiled GEMM with fused epilogue."""
    w, b = wb
    kh, kw, cin, cout = w.shape
    n = x.shape[0]
    if kh == 1 and kw == 1:
        xs = x[:, ::stride, ::stride, :] if stride > 1 else x
        ho, wo = xs.shape[1], xs.shape[2]
        a = xs.reshape(n * ho * wo, cin)
    else:
        # TODO(synk): fold the kh*kw tap shifts into the matmul K-grid
        # (element-offset index_maps / manual DMA) instead of an HBM im2col.
        cols, ho, wo = _im2col(x, kh, kw, stride, pad)
        a = cols.reshape(n * ho * wo, kh * kw * cin)
    res2 = residual.reshape(n * ho * wo, cout) if residual is not None else None
    out = matmul_fused(a, w.reshape(kh * kw * cin, cout), b,
                       residual=res2, relu=relu, out_dtype=out_dtype)
    return out.reshape(n, ho, wo, cout)


# ---------------------------------------------------------------------------
# Parameters (deterministic synthetic init - no checkpoint loading)
# ---------------------------------------------------------------------------
def _fold_bn(w, gamma, beta, mean, var, eps=1e-5):
    s = gamma / jnp.sqrt(var + eps)
    return (w * s[None, None, None, :]).astype(jnp.bfloat16), \
        (beta - mean * s).astype(jnp.float32)


def build_params(seed=0):
    base = jax.random.PRNGKey(seed)
    counter = [0]

    def next_key():
        counter[0] += 1
        return jax.random.fold_in(base, counter[0])

    def conv_bn_params(kh, kw, cin, cout):
        std = (2.0 / (kh * kw * cin)) ** 0.5
        w = std * jax.random.normal(next_key(), (kh, kw, cin, cout),
                                    dtype=jnp.float32)
        gamma = jnp.ones((cout,), jnp.float32)
        beta = jnp.zeros((cout,), jnp.float32)
        mean = jnp.zeros((cout,), jnp.float32)
        var = jnp.ones((cout,), jnp.float32)
        return _fold_bn(w, gamma, beta, mean, var)

    params = {"conv1": conv_bn_params(7, 7, 3, 64)}

    layers = []
    inplanes = 64
    expansion = 4
    for (nblocks, planes, layer_stride) in [(3, 64, 1), (4, 128, 2),
                                            (6, 256, 2), (3, 512, 2)]:
        blocks = []
        for bidx in range(nblocks):
            stride = layer_stride if bidx == 0 else 1
            blk = {"stride": stride,
                   "conv1": conv_bn_params(1, 1, inplanes, planes),
                   "conv2": conv_bn_params(3, 3, planes, planes),
                   "conv3": conv_bn_params(1, 1, planes, planes * expansion)}
            if stride != 1 or inplanes != planes * expansion:
                blk["downsample"] = conv_bn_params(1, 1, inplanes,
                                                   planes * expansion)
            blocks.append(blk)
            inplanes = planes * expansion
        layers.append(blocks)
    params["layers"] = layers

    # Trainable head: nn.Linear(2048, 512), stored pre-transposed (K, N).
    fan_in = 2048
    bound = 1.0 / (fan_in ** 0.5)
    params["fc_w"] = jax.random.uniform(next_key(), (fan_in, 512),
                                        minval=-bound, maxval=bound,
                                        dtype=jnp.float32)
    params["fc_b"] = jax.random.uniform(next_key(), (512,),
                                        minval=-bound, maxval=bound,
                                        dtype=jnp.float32)
    return params


# ---------------------------------------------------------------------------
# Forward pass
# ---------------------------------------------------------------------------
def bottleneck(x, blk):
    stride = blk["stride"]
    if "downsample" in blk:
        identity = conv_bn(x, blk["downsample"], stride=stride, pad=0,
                           relu=False)
    else:
        identity = x
    out = conv_bn(x, blk["conv1"], stride=1, pad=0, relu=True)
    out = conv_bn(out, blk["conv2"], stride=stride, pad=1, relu=True)
    # conv3 + BN + residual add + ReLU fused into one matmul epilogue.
    out = conv_bn(out, blk["conv3"], stride=1, pad=0, relu=True,
                  residual=identity)
    return out


def encoder_cnn_forward(images_nchw, params):
    """EncoderCNN.forward: resnet(x).squeeze() -> fc -> relu."""
    x = jnp.transpose(images_nchw, (0, 2, 3, 1)).astype(jnp.bfloat16)  # NCHW->NHWC
    x = conv_bn(x, params["conv1"], stride=2, pad=3, relu=True)   # conv1+bn1+relu
    x = maxpool_3x3_s2(x)                                          # 3x3 s2 p1
    for layer in params["layers"]:                                 # layer1..layer4
        for blk in layer:
            x = bottleneck(x, blk)
    feats = global_avgpool(x)                                      # (N, 2048) f32
    out = matmul_fused(feats, params["fc_w"], params["fc_b"],
                       relu=True, out_dtype=jnp.float32)           # (N, 512)
    if out.shape[0] == 1:      # mirror torch .squeeze() when batch == 1
        out = out[0]
    return out


if __name__ == "__main__":
    params = build_params(seed=0)
    images = jax.random.normal(jax.random.PRNGKey(0), (2, 3, 16, 16),
                               dtype=jnp.float32)
    features = encoder_cnn_forward(images, params)
    features = jax.block_until_ready(features)
    assert features.shape == (2, 512), features.shape
    assert bool(jnp.all(jnp.isfinite(features))), "non-finite output"
    print("KERNEL_OK")
</pallas_src>

<mosaic_0001>
module attributes {stable_mosaic.version = 11 : i64} {
  func.func @_mm_kernel(%arg0: i32, %arg1: i32, %arg2: i32, %arg3: memref<128x256xbf16, #tpu.memory_space<vmem>>, %arg4: memref<256x128xbf16, #tpu.memory_space<vmem>>, %arg5: memref<1x128xf32, #tpu.memory_space<vmem>>, %arg6: memref<128x128xbf16, #tpu.memory_space<vmem>>, %arg7: memref<128x128xf32, #tpu.memory_space<vmem>>) attributes {dimension_semantics = [#tpu.dimension_semantics<parallel>, #tpu.dimension_semantics<parallel>, #tpu.dimension_semantics<arbitrary>], iteration_bounds = array<i64: 1, 1, 1>, scalar_prefetch = 0 : i64, scratch_operands = 1 : i64, tpu.core_type = #tpu.core_type<tc>, window_params = [{transform_indices = @transform_0, window_bounds = array<i64: 128, 256>}, {transform_indices = @transform_1, window_bounds = array<i64: 256, 128>}, {transform_indices = @transform_2, window_bounds = array<i64: 1, 128>}, {transform_indices = @transform_3, window_bounds = array<i64: 128, 128>}]} {
    %c0_i32 = arith.constant 0 : i32
    %0 = arith.cmpi eq, %arg2, %c0_i32 : i32
    %1 = arith.extui %0 : i1 to i32
    %c0_i32_0 = arith.constant 0 : i32
    %2 = arith.cmpi ne, %1, %c0_i32_0 : i32
    scf.if %2 {
      %cst_10 = arith.constant 0.000000e+00 : f32
      %12 = vector.broadcast %cst_10 : f32 to vector<128x128xf32>
      %c0_11 = arith.constant 0 : index
      %c0_12 = arith.constant 0 : index
      %13 = vector.load %arg7[%c0_11, %c0_12] : memref<128x128xf32, #tpu.memory_space<vmem>>, vector<128x128xf32>
      tpu.vector_store %arg7[%c0_11, %c0_12], %12 {strides = array<i32>} : memref<128x128xf32, #tpu.memory_space<vmem>>, vector<128x128xf32>,
    } else {
    }
    %c0 = arith.constant 0 : index
    %c0_1 = arith.constant 0 : index
    %3 = vector.load %arg7[%c0, %c0_1] : memref<128x128xf32, #tpu.memory_space<vmem>>, vector<128x128xf32>
    %c0_2 = arith.constant 0 : index
    %c0_3 = arith.constant 0 : index
    %4 = vector.load %arg3[%c0_2, %c0_3] : memref<128x256xbf16, #tpu.memory_space<vmem>>, vector<128x256xbf16>
    %c0_4 = arith.constant 0 : index
    %c0_5 = arith.constant 0 : index
    %5 = vector.load %arg4[%c0_4, %c0_5] : memref<256x128xbf16, #tpu.memory_space<vmem>>, vector<256x128xbf16>
    %cst = arith.constant dense<0.000000e+00> : vector<128x128xf32>
    %6 = tpu.matmul %4, %5, %cst {dimension_numbers = #tpu.dot_dimension_numbers<[1], [0], [0], [1], [0, 0, 1, 1], [], []>} : vector<128x256xbf16>, vector<256x128xbf16>, vector<128x128xf32> -> vector<128x128xf32>
    %7 = arith.addf %3, %6 : vector<128x128xf32>
    %c0_6 = arith.constant 0 : index
    %c0_7 = arith.constant 0 : index
    %8 = vector.load %arg7[%c0_6, %c0_7] : memref<128x128xf32, #tpu.memory_space<vmem>>, vector<128x128xf32>
    tpu.vector_store %arg7[%c0_6, %c0_7], %7 {strides = array<i32>} : memref<128x128xf32, #tpu.memory_space<vmem>>, vector<128x128xf32>,
    %c0_i32_8 = arith.constant 0 : i32
    %9 = arith.cmpi eq, %arg2, %c0_i32_8 : i32
    %10 = arith.extui %9 : i1 to i32
    %c0_i32_9 = arith.constant 0 : i32
    %11 = arith.cmpi ne, %10, %c0_i32_9 : i32
    scf.if %11 {
      %c0_10 = arith.constant 0 : index
      %c0_11 = arith.constant 0 : index
      %12 = vector.load %arg7[%c0_10, %c0_11] : memref<128x128xf32, #tpu.memory_space<vmem>>, vector<128x128xf32>
      %c0_12 = arith.constant 0 : index
      %c0_13 = arith.constant 0 : index
      %13 = vector.load %arg5[%c0_12, %c0_13] : memref<1x128xf32, #tpu.memory_space<vmem>>, vector<1x128xf32>
      %14 = vector.broadcast %13 : vector<1x128xf32> to vector<128x128xf32>
      %15 = arith.addf %12, %14 : vector<128x128xf32>
      %cst_14 = arith.constant 0.000000e+00 : f32
      %16 = vector.broadcast %cst_14 : f32 to vector<128x128xf32>
      %17 = arith.maximumf %15, %16 : vector<128x128xf32>
      %18 = arith.truncf %17 : vector<128x128xf32> to vector<128x128xbf16>
      %c0_15 = arith.constant 0 : index
      %c0_16 = arith.constant 0 : index
      %19 = vector.load %arg6[%c0_15, %c0_16] : memref<128x128xbf16, #tpu.memory_space<vmem>>, vector<128x128xbf16>
      tpu.vector_store %arg6[%c0_15, %c0_16], %18 {strides = array<i32>} : memref<128x128xbf16, #tpu.memory_space<vmem>>, vector<128x128xbf16>,
    } else {
    }
    return
  }
  func.func @transform_0(%arg0: i32, %arg1: i32, %arg2: i32) -> (i32, i32) {
    %c0_i32 = arith.constant 0 : i32
    return %arg0, %arg2 : i32, i32
  }
  func.func @transform_1(%arg0: i32, %arg1: i32, %arg2: i32) -> (i32, i32) {
    %c0_i32 = arith.constant 0 : i32
    return %arg2, %arg1 : i32, i32
  }
  func.func @transform_2(%arg0: i32, %arg1: i32, %arg2: i32) -> (i32, i32) {
    %c0_i32 = arith.constant 0 : i32
    %c0_i32_0 = arith.constant 0 : i32
    return %c0_i32, %arg1 : i32, i32
  }
  func.func @transform_3(%arg0: i32, %arg1: i32, %arg2: i32) -> (i32, i32) {
    %c0_i32 = arith.constant 0 : i32
    return %arg0, %arg1 : i32, i32
  }
}

</mosaic_0001>

<llo_original>
// kernel: tpu_custom_call.1
$region0: #{tpu_custom_call.1}
  #allocation0 [shape = 'u32[]', space=smem, size = 0x4, offset = 0x4, fixed_abs, tag = 'smem constant byte address 0x4 - core index']
  #allocation1 [shape = 'u32[144,128]{1,0:T(1,128)}', space=vmem, size = 0x12000, scoped, tag = 'internal scratch']
  #allocation2 [shape = 'f32[128,128]{1,0:T(8,128)}', space=vmem, size = 0x10000, scoped, tag = 'scratch operand']
  %s0 = inlined_call_operand.hbm [shape: bf16[128,256], index: 0, kind: input, shape index: {}]
  %s1 = inlined_call_operand.hbm [shape: bf16[256,128], index: 1, kind: input, shape index: {}]
  %s2 = inlined_call_operand.vmem [shape: f32[1,128], index: 2, kind: input, shape index: {}]
  %s3 = inlined_call_operand.hbm [shape: bf16[128,128], index: 3, kind: output, shape index: {}]
  %s4 = sld [smem:[#allocation0]]
  $region38: #{tpu_custom_call.1} parent=0
    _
  %s6 = ssub.s32 1, %s4
  %s7 = scalar_select 0, %s6, %s4
  $region1: #{tpu_custom_call.1} parent=0
    #allocation3 [shape = 'u8[65536]{0}', space=vmem, size = 0x10000, scoped, tag = 'input window, operand 0, single buffered']
    #allocation4 [shape = 's32[1]{0}', space=sflag, size = 0x4, scoped, tag = 'scoped memory for tpu_custom_call.1']
    #allocation5 [shape = 's32[1]{0}', space=sflag, size = 0x4, scoped, tag = 'scoped memory for tpu_custom_call.1']
    #allocation6 [shape = 'u8[65536]{0}', space=vmem, size = 0x10000, scoped, tag = 'input window, operand 1, single buffered']
    #allocation7 [shape = 's32[1]{0}', space=sflag, size = 0x4, scoped, tag = 'scoped memory for tpu_custom_call.1']
    #allocation8 [shape = 'u8[32768]{0}', space=vmem, size = 0x8000, scoped, tag = 'output window, operand 0, single buffered']
    %8 = vsyncpa [#allocation4], 0
    %9 = vsyncpa [#allocation7], 0
    %10 = vsyncpa [#allocation5], 0
    // Predicated region
    $region2: #{tpu_custom_call.1} parent=1 // pred_check
      _
    $region3: #{tpu_custom_call.1} parent=1 // pred_check_branch
      %12 = sbr.rel (0) target = $region5
    $region4: #{tpu_custom_call.1} parent=1 // pred_region
      %s14 = ssub.s32 2048, 2048
      %15 = vsyncadd [#allocation4], %s14
      %s16 = sshll.u32 [#allocation3], 4
      %s17 = int_to_ptr.vmem [resolvable:$true] %s16
      %22 = dma.hbm_to_vmem [thread:$0]  %s0, 2048, %s17, [#allocation4], 128, 128, 8
    $region5: #{tpu_custom_call.1} parent=1 // pred_fallthru
      _
    // Predicated region
    $region6: #{tpu_custom_call.1} parent=1 // pred_check
      _
    $region7: #{tpu_custom_call.1} parent=1 // pred_check_branch
      %24 = sbr.rel (0) target = $region9
    $region8: #{tpu_custom_call.1} parent=1 // pred_region
      %s26 = ssub.s32 2048, 2048
      %27 = vsyncadd [#allocation7], %s26
      %s28 = sshll.u32 [#allocation6], 4
      %s29 = int_to_ptr.vmem [resolvable:$true] %s28
      %34 = dma.hbm_to_vmem [thread:$0]  %s1, 2048, %s29, [#allocation7], 64, 64, 4
    $region9: #{tpu_custom_call.1} parent=1 // pred_fallthru
      _
    // Predicated region
    $region10: #{tpu_custom_call.1} parent=1 // pred_check
      _
    $region11: #{tpu_custom_call.1} parent=1 // pred_check_branch
      %36 = sbr.rel (0) target = $region13
    $region12: #{tpu_custom_call.1} parent=1 // pred_region
      _
    $region13: #{tpu_custom_call.1} parent=1 // pred_fallthru
      _
    // Predicated region
    $region14: #{tpu_custom_call.1} parent=1 // pred_check
      _
    $region15: #{tpu_custom_call.1} parent=1 // pred_check_branch
      %38 = sbr.rel (0) target = $region17
    $region16: #{tpu_custom_call.1} parent=1 // pred_region
      %39 = dma.done [#allocation4], 2048
    $region17: #{tpu_custom_call.1} parent=1 // pred_fallthru
      _
    // Predicated region
    $region18: #{tpu_custom_call.1} parent=1 // pred_check
      _
    $region19: #{tpu_custom_call.1} parent=1 // pred_check_branch
      %41 = sbr.rel (0) target = $region21
    $region20: #{tpu_custom_call.1} parent=1 // pred_region
      %42 = dma.done [#allocation7], 2048
    $region21: #{tpu_custom_call.1} parent=1 // pred_fallthru
      _
    %p44 = scmp.eq.s32.totalorder 0, 0
    // Predicated region
    $region22: #{tpu_custom_call.1} parent=1 // pred_check
      %p45 = pneg %p44
    $region23: #{tpu_custom_call.1} parent=1 // pred_check_branch
      %47 = sbr.rel (%p45) target = $region25
    $region24: #{tpu_custom_call.1} parent=1 // pred_region
      %48 = vst [vmem:[#allocation2] sm:$0xff] 0.0
      %49 = vst [vmem:[#allocation2 + $0x8] sm:$0xff] 0.0
      %50 = vst [vmem:[#allocation2 + $0x10] sm:$0xff] 0.0
      %51 = vst [vmem:[#allocation2 + $0x18] sm:$0xff] 0.0
      %52 = vst [vmem:[#allocation2 + $0x20] sm:$0xff] 0.0
      %53 = vst [vmem:[#allocation2 + $0x28] sm:$0xff] 0.0
      %54 = vst [vmem:[#allocation2 + $0x30] sm:$0xff] 0.0
      %55 = vst [vmem:[#allocation2 + $0x38] sm:$0xff] 0.0
      %56 = vst [vmem:[#allocation2 + $0x40] sm:$0xff] 0.0
      %57 = vst [vmem:[#allocation2 + $0x48] sm:$0xff] 0.0
      %58 = vst [vmem:[#allocation2 + $0x50] sm:$0xff] 0.0
      %59 = vst [vmem:[#allocation2 + $0x58] sm:$0xff] 0.0
      %60 = vst [vmem:[#allocation2 + $0x60] sm:$0xff] 0.0
      %61 = vst [vmem:[#allocation2 + $0x68] sm:$0xff] 0.0
      %62 = vst [vmem:[#allocation2 + $0x70] sm:$0xff] 0.0
      %63 = vst [vmem:[#allocation2 + $0x78] sm:$0xff] 0.0
    $region25: #{tpu_custom_call.1} parent=1 // pred_fallthru
      _
    %v64 = vld [vmem:[#allocation2] sm:$0xff]
    %v65 = vld [vmem:[#allocation2 + $0x8] sm:$0xff]
    %v66 = vld [vmem:[#allocation2 + $0x10] sm:$0xff]
    %v67 = vld [vmem:[#allocation2 + $0x18] sm:$0xff]
    %v68 = vld [vmem:[#allocation2 + $0x20] sm:$0xff]
    %v69 = vld [vmem:[#allocation2 + $0x28] sm:$0xff]
    %v70 = vld [vmem:[#allocation2 + $0x30] sm:$0xff]
    %v71 = vld [vmem:[#allocation2 + $0x38] sm:$0xff]
    %v72 = vld [vmem:[#allocation2 + $0x40] sm:$0xff]
    %v73 = vld [vmem:[#allocation2 + $0x48] sm:$0xff]
    %v74 = vld [vmem:[#allocation2 + $0x50] sm:$0xff]
    %v75 = vld [vmem:[#allocation2 + $0x58] sm:$0xff]
    %v76 = vld [vmem:[#allocation2 + $0x60] sm:$0xff]
    %v77 = vld [vmem:[#allocation2 + $0x68] sm:$0xff]
    %v78 = vld [vmem:[#allocation2 + $0x70] sm:$0xff]
    %v79 = vld [vmem:[#allocation2 + $0x78] sm:$0xff]
    %v80 = vld [vmem:[#allocation3] sm:$0xff]
    %v81 = vld [vmem:[#allocation3 + $0x8] sm:$0xff]
    %v82 = vld [vmem:[#allocation3 + $0x10] sm:$0xff]
    %v83 = vld [vmem:[#allocation3 + $0x18] sm:$0xff]
    %v84 = vld [vmem:[#allocation3 + $0x20] sm:$0xff]
    %v85 = vld [vmem:[#allocation3 + $0x28] sm:$0xff]
    %v86 = vld [vmem:[#allocation3 + $0x30] sm:$0xff]
    %v87 = vld [vmem:[#allocation3 + $0x38] sm:$0xff]
    %v88 = vld [vmem:[#allocation3 + $0x40] sm:$0xff]
    %v89 = vld [vmem:[#allocation3 + $0x48] sm:$0xff]
    %v90 = vld [vmem:[#allocation3 + $0x50] sm:$0xff]
    %v91 = vld [vmem:[#allocation3 + $0x58] sm:$0xff]
    %v92 = vld [vmem:[#allocation3 + $0x60] sm:$0xff]
    %v93 = vld [vmem:[#allocation3 + $0x68] sm:$0xff]
    %v94 = vld [vmem:[#allocation3 + $0x70] sm:$0xff]
    %v95 = vld [vmem:[#allocation3 + $0x78] sm:$0xff]
    %v96 = vld [vmem:[#allocation6] sm:$0xf]
    %v97 = vld [vmem:[#allocation6 + $0x4] sm:$0xf]
    %v98 = vld [vmem:[#allocation6 + $0x8] sm:$0xf]
    %v99 = vld [vmem:[#allocation6 + $0xc] sm:$0xf]
    %v100 = vld [vmem:[#allocation6 + $0x10] sm:$0xf]
    %v101 = vld [vmem:[#allocation6 + $0x14] sm:$0xf]
    %v102 = vld [vmem:[#allocation6 + $0x18] sm:$0xf]
    %v103 = vld [vmem:[#allocation6 + $0x1c] sm:$0xf]
    %v104 = vld [vmem:[#allocation6 + $0x20] sm:$0xf]
    %v105 = vld [vmem:[#allocation6 + $0x24] sm:$0xf]
    %v106 = vld [vmem:[#allocation6 + $0x28] sm:$0xf]
    %v107 = vld [vmem:[#allocation6 + $0x2c] sm:$0xf]
    %v108 = vld [vmem:[#allocation6 + $0x30] sm:$0xf]
    %v109 = vld [vmem:[#allocation6 + $0x34] sm:$0xf]
    %v110 = vld [vmem:[#allocation6 + $0x38] sm:$0xf]
    %v111 = vld [vmem:[#allocation6 + $0x3c] sm:$0xf]
    %v112 = vld [vmem:[#allocation6 + $0x40] sm:$0xf]
    %v113 = vld [vmem:[#allocation6 + $0x44] sm:$0xf]
    %v114 = vld [vmem:[#allocation6 + $0x48] sm:$0xf]
    %v115 = vld [vmem:[#allocation6 + $0x4c] sm:$0xf]
    %v116 = vld [vmem:[#allocation6 + $0x50] sm:$0xf]
    %v117 = vld [vmem:[#allocation6 + $0x54] sm:$0xf]
    %v118 = vld [vmem:[#allocation6 + $0x58] sm:$0xf]
    %v119 = vld [vmem:[#allocation6 + $0x5c] sm:$0xf]
    %v120 = vld [vmem:[#allocation6 + $0x60] sm:$0xf]
    %v121 = vld [vmem:[#allocation6 + $0x64] sm:$0xf]
    %v122 = vld [vmem:[#allocation6 + $0x68] sm:$0xf]
    %v123 = vld [vmem:[#allocation6 + $0x6c] sm:$0xf]
    %v124 = vld [vmem:[#allocation6 + $0x70] sm:$0xf]
    %v125 = vld [vmem:[#allocation6 + $0x74] sm:$0xf]
    %v126 = vld [vmem:[#allocation6 + $0x78] sm:$0xf]
    %v127 = vld [vmem:[#allocation6 + $0x7c] sm:$0xf]
    %v144 = vunpack.c.l.b16 %v80
    %v145 = vunpack.c.h.b16 %v80
    %v146 = vunpack.c.l.b16 %v81
    %v147 = vunpack.c.h.b16 %v81
    %v148 = vunpack.c.l.b16 %v82
    %v149 = vunpack.c.h.b16 %v82
    %v150 = vunpack.c.l.b16 %v83
    %v151 = vunpack.c.h.b16 %v83
    %v152 = vunpack.c.l.b16 %v84
    %v153 = vunpack.c.h.b16 %v84
    %v154 = vunpack.c.l.b16 %v85
    %v155 = vunpack.c.h.b16 %v85
    %v156 = vunpack.c.l.b16 %v86
    %v157 = vunpack.c.h.b16 %v86
    %v158 = vunpack.c.l.b16 %v87
    %v159 = vunpack.c.h.b16 %v87
    %v160 = vunpack.c.l.b16 %v88
    %v161 = vunpack.c.h.b16 %v88
    %v162 = vunpack.c.l.b16 %v89
    %v163 = vunpack.c.h.b16 %v89
    %v164 = vunpack.c.l.b16 %v90
    %v165 = vunpack.c.h.b16 %v90
    %v166 = vunpack.c.l.b16 %v91
    %v167 = vunpack.c.h.b16 %v91
    %v168 = vunpack.c.l.b16 %v92
    %v169 = vunpack.c.h.b16 %v92
    %v170 = vunpack.c.l.b16 %v93
    %v171 = vunpack.c.h.b16 %v93
    %v172 = vunpack.c.l.b16 %v94
    %v173 = vunpack.c.h.b16 %v94
    %v174 = vunpack.c.l.b16 %v95
    %v175 = vunpack.c.h.b16 %v95
    %v176 = vpack.c.b16 %v146, %v144
    %v177 = vpack.c.b16 %v147, %v145
    %v178 = vpack.c.b16 %v150, %v148
    %v179 = vpack.c.b16 %v151, %v149
    %v180 = vpack.c.b16 %v154, %v152
    %v181 = vpack.c.b16 %v155, %v153
    %v182 = vpack.c.b16 %v158, %v156
    %v183 = vpack.c.b16 %v159, %v157
    %v184 = vpack.c.b16 %v162, %v160
    %v185 = vpack.c.b16 %v163, %v161
    %v186 = vpack.c.b16 %v166, %v164
    %v187 = vpack.c.b16 %v167, %v165
    %v188 = vpack.c.b16 %v170, %v168
    %v189 = vpack.c.b16 %v171, %v169
    %v190 = vpack.c.b16 %v174, %v172
    %v191 = vpack.c.b16 %v175, %v173
    %v240 = vunpack.c.l.b16 %v96
    %v241 = vunpack.c.l.b16 %v97
    %v242 = vunpack.c.l.b16 %v98
    %v243 = vunpack.c.l.b16 %v99
    %v244 = vunpack.c.l.b16 %v100
    %v245 = vunpack.c.l.b16 %v101
    %v246 = vunpack.c.l.b16 %v102
    %v247 = vunpack.c.l.b16 %v103
    %v248 = vunpack.c.l.b16 %v104
    %v249 = vunpack.c.l.b16 %v105
    %v250 = vunpack.c.l.b16 %v106
    %v251 = vunpack.c.l.b16 %v107
    %v252 = vunpack.c.l.b16 %v108
    %v253 = vunpack.c.l.b16 %v109
    %v254 = vunpack.c.l.b16 %v110
    %v255 = vunpack.c.l.b16 %v111
    %v256 = vunpack.c.l.b16 %v112
    %v257 = vunpack.c.l.b16 %v113
    %v258 = vunpack.c.l.b16 %v114
    %v259 = vunpack.c.l.b16 %v115
    %v260 = vunpack.c.l.b16 %v116
    %v261 = vunpack.c.l.b16 %v117
    %v262 = vunpack.c.l.b16 %v118
    %v263 = vunpack.c.l.b16 %v119
    %v264 = vunpack.c.l.b16 %v120
    %v265 = vunpack.c.l.b16 %v121
    %v266 = vunpack.c.l.b16 %v122
    %v267 = vunpack.c.l.b16 %v123
    %v268 = vunpack.c.l.b16 %v124
    %v269 = vunpack.c.l.b16 %v125
    %v270 = vunpack.c.l.b16 %v126
    %v271 = vunpack.c.l.b16 %v127
    %v272 = vpack.c.b16 %v241, %v240
    %v273 = vpack.c.b16 %v243, %v242
    %v274 = vpack.c.b16 %v245, %v244
    %v275 = vpack.c.b16 %v247, %v246
    %v276 = vpack.c.b16 %v249, %v248
    %v277 = vpack.c.b16 %v251, %v250
    %v278 = vpack.c.b16 %v253, %v252
    %v279 = vpack.c.b16 %v255, %v254
    %v280 = vpack.c.b16 %v257, %v256
    %v281 = vpack.c.b16 %v259, %v258
    %v282 = vpack.c.b16 %v261, %v260
    %v283 = vpack.c.b16 %v263, %v262
    %v284 = vpack.c.b16 %v265, %v264
    %v285 = vpack.c.b16 %v267, %v266
    %v286 = vpack.c.b16 %v269, %v268
    %v287 = vpack.c.b16 %v271, %v270
    %304 = vmatprep.subr.bf16.mxu0 0
    %305 = vmatpush1.bf16.msra.mxu0 %v272
    %306 = vmatprep.subr.bf16.mxu0 0
    %307 = vmatpush1.bf16.msra.mxu0 %v273
    %308 = vmatprep.subr.bf16.mxu0 0
    %309 = vmatpush1.bf16.msra.mxu0 %v274
    %310 = vmatprep.subr.bf16.mxu0 0
    %311 = vmatpush1.bf16.msra.mxu0 %v275
    %312 = vmatprep.subr.bf16.mxu0 0
    %313 = vmatpush1.bf16.msra.mxu0 %v276
    %314 = vmatprep.subr.bf16.mxu0 0
    %315 = vmatpush1.bf16.msra.mxu0 %v277
    %316 = vmatprep.subr.bf16.mxu0 0
    %317 = vmatpush1.bf16.msra.mxu0 %v278
    %318 = vmatprep.subr.bf16.mxu0 0
    %319 = vmatpush1.bf16.msra.mxu0 %v279
    %320 = vmatprep.subr.bf16.mxu0 0
    %321 = vmatpush1.bf16.msra.mxu0 %v280
    %322 = vmatprep.subr.bf16.mxu0 0
    %323 = vmatpush1.bf16.msra.mxu0 %v281
    %324 = vmatprep.subr.bf16.mxu0 0
    %325 = vmatpush1.bf16.msra.mxu0 %v282
    %326 = vmatprep.subr.bf16.mxu0 0
    %327 = vmatpush1.bf16.msra.mxu0 %v283
    %328 = vmatprep.subr.bf16.mxu0 0
    %329 = vmatpush1.bf16.msra.mxu0 %v284
    %330 = vmatprep.subr.bf16.mxu0 0
    %331 = vmatpush1.bf16.msra.mxu0 %v285
    %332 = vmatprep.subr.bf16.mxu0 0
    %333 = vmatpush1.bf16.msra.mxu0 %v286
    %334 = vmatprep.subr.bf16.mxu0 0
    %335 = vmatpush1.bf16.msra.mxu0 %v287
    %336 = vmatprep.mubr.bf16.mxu0 %v177
    %337 = vmatmul.mubr.bf16.gmra.mrb[0].mxu0 %v176
    %v338 = vpop.f32.mrb[0].mxu0
    %v339 = vadd.f32 0.0, %v338
    %v340 = vpop.f32.mrb[0].mxu0
    %v341 = vpop.f32.mrb[0].mxu0
    %v342 = vadd.f32 0.0, %v341
    %v343 = vpop.f32.mrb[0].mxu0
    %344 = vmatprep.mubr.bf16.mxu0 %v179
    %345 = vmatmul.mubr.bf16.gmra.mrb[0].mxu0 %v178
    %v346 = vpop.f32.mrb[0].mxu0
    %v347 = vadd.f32 0.0, %v346
    %v348 = vpop.f32.mrb[0].mxu0
    %v349 = vpop.f32.mrb[0].mxu0
    %v350 = vadd.f32 0.0, %v349
    %v351 = vpop.f32.mrb[0].mxu0
    %352 = vmatprep.mubr.bf16.mxu0 %v181
    %353 = vmatmul.mubr.bf16.gmra.mrb[0].mxu0 %v180
    %v354 = vpop.f32.mrb[0].mxu0
    %v355 = vadd.f32 0.0, %v354
    %v356 = vpop.f32.mrb[0].mxu0
    %v357 = vpop.f32.mrb[0].mxu0
    %v358 = vadd.f32 0.0, %v357
    %v359 = vpop.f32.mrb[0].mxu0
    %360 = vmatprep.mubr.bf16.mxu0 %v183
    %361 = vmatmul.mubr.bf16.gmra.mrb[0].mxu0 %v182
    %v362 = vpop.f32.mrb[0].mxu0
    %v363 = vadd.f32 0.0, %v362
    %v364 = vpop.f32.mrb[0].mxu0
    %v365 = vpop.f32.mrb[0].mxu0
    %v366 = vadd.f32 0.0, %v365
    %v367 = vpop.f32.mrb[0].mxu0
    %368 = vmatprep.mubr.bf16.mxu0 %v185
    %369 = vmatmul.mubr.bf16.gmra.mrb[0].mxu0 %v184
    %v370 = vpop.f32.mrb[0].mxu0
    %v371 = vadd.f32 0.0, %v370
    %v372 = vpop.f32.mrb[0].mxu0
    %v373 = vpop.f32.mrb[0].mxu0
    %v374 = vadd.f32 0.0, %v373
    %v375 = vpop.f32.mrb[0].mxu0
    %376 = vmatprep.mubr.bf16.mxu0 %v187
    %377 = vmatmul.mubr.bf16.gmra.mrb[0].mxu0 %v186
    %v378 = vpop.f32.mrb[0].mxu0
    %v379 = vadd.f32 0.0, %v378
    %v380 = vpop.f32.mrb[0].mxu0
    %v381 = vpop.f32.mrb[0].mxu0
    %v382 = vadd.f32 0.0, %v381
    %v383 = vpop.f32.mrb[0].mxu0
    %384 = vmatprep.mubr.bf16.mxu0 %v189
    %385 = vmatmul.mubr.bf16.gmra.mrb[0].mxu0 %v188
    %v386 = vpop.f32.mrb[0].mxu0
    %v387 = vadd.f32 0.0, %v386
    %v388 = vpop.f32.mrb[0].mxu0
    %v389 = vpop.f32.mrb[0].mxu0
    %v390 = vadd.f32 0.0, %v389
    %v391 = vpop.f32.mrb[0].mxu0
    %392 = vmatprep.mubr.bf16.mxu0 %v191
    %393 = vmatmul.mubr.bf16.gmra.mrb[0].mxu0 %v190
    %v394 = vpop.f32.mrb[0].mxu0
    %v395 = vadd.f32 0.0, %v394
    %v396 = vpop.f32.mrb[0].mxu0
    %v397 = vpop.f32.mrb[0].mxu0
    %v398 = vadd.f32 0.0, %v397
    %v399 = vpop.f32.mrb[0].mxu0
    %400 = vdwg.mxu0
    %v401 = vadd.f32 %v64, %v339
    %v402 = vadd.f32 %v65, %v342
    %v403 = vadd.f32 %v66, %v347
    %v404 = vadd.f32 %v67, %v350
    %v405 = vadd.f32 %v68, %v355
    %v406 = vadd.f32 %v69, %v358
    %v407 = vadd.f32 %v70, %v363
    %v408 = vadd.f32 %v71, %v366
    %v409 = vadd.f32 %v72, %v371
    %v410 = vadd.f32 %v73, %v374
    %v411 = vadd.f32 %v74, %v379
    %v412 = vadd.f32 %v75, %v382
    %v413 = vadd.f32 %v76, %v387
    %v414 = vadd.f32 %v77, %v390
    %v415 = vadd.f32 %v78, %v395
    %v416 = vadd.f32 %v79, %v398
    %417 = vst [vmem:[#allocation2] sm:$0xff] %v401
    %418 = vst [vmem:[#allocation2 + $0x8] sm:$0xff] %v402
    %419 = vst [vmem:[#allocation2 + $0x10] sm:$0xff] %v403
    %420 = vst [vmem:[#allocation2 + $0x18] sm:$0xff] %v404
    %421 = vst [vmem:[#allocation2 + $0x20] sm:$0xff] %v405
    %422 = vst [vmem:[#allocation2 + $0x28] sm:$0xff] %v406
    %423 = vst [vmem:[#allocation2 + $0x30] sm:$0xff] %v407
    %424 = vst [vmem:[#allocation2 + $0x38] sm:$0xff] %v408
    %425 = vst [vmem:[#allocation2 + $0x40] sm:$0xff] %v409
    %426 = vst [vmem:[#allocation2 + $0x48] sm:$0xff] %v410
    %427 = vst [vmem:[#allocation2 + $0x50] sm:$0xff] %v411
    %428 = vst [vmem:[#allocation2 + $0x58] sm:$0xff] %v412
    %429 = vst [vmem:[#allocation2 + $0x60] sm:$0xff] %v413
    %430 = vst [vmem:[#allocation2 + $0x68] sm:$0xff] %v414
    %431 = vst [vmem:[#allocation2 + $0x70] sm:$0xff] %v415
    %432 = vst [vmem:[#allocation2 + $0x78] sm:$0xff] %v416
    // Predicated region
    $region26: #{tpu_custom_call.1} parent=1 // pred_check
      %p433 = pneg %p44
    $region27: #{tpu_custom_call.1} parent=1 // pred_check_branch
      %435 = sbr.rel (%p433) target = $region29
    $region28: #{tpu_custom_call.1} parent=1 // pred_region
      %v436 = vld [vmem:[#allocation2] sm:$0xff]
      %v437 = vld [vmem:[#allocation2 + $0x8] sm:$0xff]
      %v438 = vld [vmem:[#allocation2 + $0x10] sm:$0xff]
      %v439 = vld [vmem:[#allocation2 + $0x18] sm:$0xff]
      %v440 = vld [vmem:[#allocation2 + $0x20] sm:$0xff]
      %v441 = vld [vmem:[#allocation2 + $0x28] sm:$0xff]
      %v442 = vld [vmem:[#allocation2 + $0x30] sm:$0xff]
      %v443 = vld [vmem:[#allocation2 + $0x38] sm:$0xff]
      %v444 = vld [vmem:[#allocation2 + $0x40] sm:$0xff]
      %v445 = vld [vmem:[#allocation2 + $0x48] sm:$0xff]
      %v446 = vld [vmem:[#allocation2 + $0x50] sm:$0xff]
      %v447 = vld [vmem:[#allocation2 + $0x58] sm:$0xff]
      %v448 = vld [vmem:[#allocation2 + $0x60] sm:$0xff]
      %v449 = vld [vmem:[#allocation2 + $0x68] sm:$0xff]
      %v450 = vld [vmem:[#allocation2 + $0x70] sm:$0xff]
      %v451 = vld [vmem:[#allocation2 + $0x78] sm:$0xff]
      %v452 = vld [vmem:[%s2] sm:$0x1]
      %v454 = vlaneseq
      %v455 = vshrl.u32 %v454, 7
      %v456 = vsub.s32 0, %v455
      %v457 = vrot.slane %v452, %v456
      %v459 = vadd.f32 %v436, %v457
      %v460 = vadd.f32 %v437, %v457
      %v461 = vadd.f32 %v438, %v457
      %v462 = vadd.f32 %v439, %v457
      %v463 = vadd.f32 %v440, %v457
      %v464 = vadd.f32 %v441, %v457
      %v465 = vadd.f32 %v442, %v457
      %v466 = vadd.f32 %v443, %v457
      %v467 = vadd.f32 %v444, %v457
      %v468 = vadd.f32 %v445, %v457
      %v469 = vadd.f32 %v446, %v457
      %v470 = vadd.f32 %v447, %v457
      %v471 = vadd.f32 %v448, %v457
      %v472 = vadd.f32 %v449, %v457
      %v473 = vadd.f32 %v450, %v457
      %v474 = vadd.f32 %v451, %v457
      %v475 = vmax.f32 %v459, 0.0
      %v476 = vmax.f32 %v460, 0.0
      %v477 = vmax.f32 %v461, 0.0
      %v478 = vmax.f32 %v462, 0.0
      %v479 = vmax.f32 %v463, 0.0
      %v480 = vmax.f32 %v464, 0.0
      %v481 = vmax.f32 %v465, 0.0
      %v482 = vmax.f32 %v466, 0.0
      %v483 = vmax.f32 %v467, 0.0
      %v484 = vmax.f32 %v468, 0.0
      %v485 = vmax.f32 %v469, 0.0
      %v486 = vmax.f32 %v470, 0.0
      %v487 = vmax.f32 %v471, 0.0
      %v488 = vmax.f32 %v472, 0.0
      %v489 = vmax.f32 %v473, 0.0
      %v490 = vmax.f32 %v474, 0.0
      %v491 = vpack.c.bf16 %v476, %v475
      %v492 = vpack.c.bf16 %v478, %v477
      %v493 = vpack.c.bf16 %v480, %v479
      %v494 = vpack.c.bf16 %v482, %v481
      %v495 = vpack.c.bf16 %v484, %v483
      %v496 = vpack.c.bf16 %v486, %v485
      %v497 = vpack.c.bf16 %v488, %v487
      %v498 = vpack.c.bf16 %v490, %v489
      %v507 = vunpack.c.l.b16 %v491
      %v508 = vunpack.c.h.b16 %v491
      %v509 = vunpack.c.l.b16 %v492
      %v510 = vunpack.c.h.b16 %v492
      %v511 = vunpack.c.l.b16 %v493
      %v512 = vunpack.c.h.b16 %v493
      %v513 = vunpack.c.l.b16 %v494
      %v514 = vunpack.c.h.b16 %v494
      %v515 = vunpack.c.l.b16 %v495
      %v516 = vunpack.c.h.b16 %v495
      %v517 = vunpack.c.l.b16 %v496
      %v518 = vunpack.c.h.b16 %v496
      %v519 = vunpack.c.l.b16 %v497
      %v520 = vunpack.c.h.b16 %v497
      %v521 = vunpack.c.l.b16 %v498
      %v522 = vunpack.c.h.b16 %v498
      %v523 = vpack.c.b16 %v507, %v507
      %v524 = vpack.c.b16 %v508, %v508
      %v525 = vpack.c.b16 %v509, %v509
      %v526 = vpack.c.b16 %v510, %v510
      %v527 = vpack.c.b16 %v511, %v511
      %v528 = vpack.c.b16 %v512, %v512
      %v529 = vpack.c.b16 %v513, %v513
      %v530 = vpack.c.b16 %v514, %v514
      %v531 = vpack.c.b16 %v515, %v515
      %v532 = vpack.c.b16 %v516, %v516
      %v533 = vpack.c.b16 %v517, %v517
      %v534 = vpack.c.b16 %v518, %v518
      %v535 = vpack.c.b16 %v519, %v519
      %v536 = vpack.c.b16 %v520, %v520
      %v537 = vpack.c.b16 %v521, %v521
      %v538 = vpack.c.b16 %v522, %v522
      %555 = vst [vmem:[#allocation8] sm:$0xf] %v523
      %556 = vst [vmem:[#allocation8 + $0x4] sm:$0xf] %v524
      %557 = vst [vmem:[#allocation8 + $0x8] sm:$0xf] %v525
      %558 = vst [vmem:[#allocation8 + $0xc] sm:$0xf] %v526
      %559 = vst [vmem:[#allocation8 + $0x10] sm:$0xf] %v527
      %560 = vst [vmem:[#allocation8 + $0x14] sm:$0xf] %v528
      %561 = vst [vmem:[#allocation8 + $0x18] sm:$0xf] %v529
      %562 = vst [vmem:[#allocation8 + $0x1c] sm:$0xf] %v530
      %563 = vst [vmem:[#allocation8 + $0x20] sm:$0xf] %v531
      %564 = vst [vmem:[#allocation8 + $0x24] sm:$0xf] %v532
      %565 = vst [vmem:[#allocation8 + $0x28] sm:$0xf] %v533
      %566 = vst [vmem:[#allocation8 + $0x2c] sm:$0xf] %v534
      %567 = vst [vmem:[#allocation8 + $0x30] sm:$0xf] %v535
      %568 = vst [vmem:[#allocation8 + $0x34] sm:$0xf] %v536
      %569 = vst [vmem:[#allocation8 + $0x38] sm:$0xf] %v537
      %570 = vst [vmem:[#allocation8 + $0x3c] sm:$0xf] %v538
    $region29: #{tpu_custom_call.1} parent=1 // pred_fallthru
      _
    // Predicated region
    $region30: #{tpu_custom_call.1} parent=1 // pred_check
      _
    $region31: #{tpu_custom_call.1} parent=1 // pred_check_branch
      %572 = sbr.rel (0) target = $region33
    $region32: #{tpu_custom_call.1} parent=1 // pred_region
      %s574 = ssub.s32 1024, 1024
      %575 = vsyncadd [#allocation5], %s574
      %s576 = sshll.u32 [#allocation8], 4
      %s577 = int_to_ptr.vmem [resolvable:$true] %s576
      %582 = dma.vmem_to_hbm [thread:$0]  %s577, 1024, %s3, [#allocation5], 64, 64, 4
    $region33: #{tpu_custom_call.1} parent=1 // pred_fallthru
      _
    // Predicated region
    $region34: #{tpu_custom_call.1} parent=1 // pred_check
      _
    $region35: #{tpu_custom_call.1} parent=1 // pred_check_branch
      %584 = sbr.rel (0) target = $region37
    $region36: #{tpu_custom_call.1} parent=1 // pred_region
      %585 = dma.done [#allocation5], 1024
    $region37: #{tpu_custom_call.1} parent=1 // pred_fallthru
      _
    %586 = vsyncpa [#allocation4], 1
    %587 = vsyncpa [#allocation7], 1
    %588 = vsyncpa [#allocation5], 1

</llo_original>
